<compile_context>
chip_gen: v6e
topology: v6e:2x2x1
jax: 0.10.0
libtpu: 0.0.40
codegen_flags: <defaults>
</compile_context>

<pallas_src>
import math
import functools

import numpy as np
import jax
import jax.numpy as jnp
from jax import lax
from jax.experimental import pallas as pl
from jax.experimental.pallas import tpu as pltpu


def _stem_kernel(x_ref, w_ref, mask_ref, bias_ref, out_ref, col_ref, *, H, W, Cin, Cout, B):
    """Single-invocation stem kernel (im2col in VMEM + one MXU matmul).

    x_ref   : [B, Cin, H*W]   input images, channel-major, spatially flattened
    w_ref   : [Cout, 72]      folded conv weights; column 8*t + ci = w[co, ci, kh, kw]*scale[co]
                              (t = kh*3 + kw), columns 8*t+Cin .. 8*t+7 are zero
    mask_ref: [72, B*H*W]     per-tap border masks replicated over Cin, tiled over B,
                              tap t at sublane rows [8t, 8t+Cin)
    bias_ref: [Cout, 1]       folded BN bias = beta - mean * gamma / sqrt(var + eps)
    out_ref : [B, Cout, H*W]  lane-dense output
    col_ref : [72, B*H*W]     VMEM im2col scratch
    """
    HW = H * W
    BHW = B * HW

    # Place the B images side-by-side along the lane axis (offsets are multiples of 128).
    if B > 1:
        x = jnp.concatenate([x_ref[b] for b in range(B)], axis=1)        # [Cin, B*HW]
    else:
        x = x_ref[0]

    # Zero the scratch once so the padding rows (never written) are exactly 0.
    col_ref[...] = jnp.zeros_like(col_ref)

    for kh in range(3):
        for kw in range(3):
            dh, dw = kh - 1, kw - 1
            s = dh * W + dw                      # flat spatial shift of this tap
            t = kh * 3 + kw
            # xs[:, p] == x[:, p + s]; out-of-image / cross-image / wrap-around positions
            # are zeroed by the border mask (== zero padding).
            xs = x if s == 0 else pltpu.roll(x, (-s) % BHW, axis=1)
            xs = xs * mask_ref[t * 8:t * 8 + Cin, :]
            col_ref[t * 8:t * 8 + Cin, :] = xs   # 8-aligned sublane store, no relayout

    # One MXU matmul replaces the 27-way broadcast outer-product chain.
    acc = jnp.dot(w_ref[...], col_ref[...], preferred_element_type=jnp.float32)  # [Cout, B*HW]

    y = acc + bias_ref[...]                      # folded BatchNorm (inference semantics)
    # exact GELU (matches torch.nn.GELU default): 0.5 * y * (1 + erf(y / sqrt(2)))
    y = 0.5 * y * (1.0 + lax.erf(y * (1.0 / math.sqrt(2.0))))

    for b in range(B):                           # lane slices at 128-multiple offsets
        out_ref[b] = y[:, b * HW:(b + 1) * HW]


def conv_nxn_bn_forward(x_nchw, weight, gamma, beta, running_mean, running_var, eps=1e-5):
    """Pallas forward of conv_nxn_bn (stem). x_nchw: [B, Cin, H, W] -> [B, Cout, H, W]."""
    B, Cin, H, W = x_nchw.shape
    Cout = weight.shape[0]                       # weight: [Cout, Cin, 3, 3] (PyTorch layout)
    assert Cin <= 8, "stem expects a small input-channel count (RGB)"
    HW = H * W
    BHW = B * HW
    K_PAD = 9 * 8                                # each tap padded to 8 sublanes

    # ---- wrapper glue: free reshapes of contiguous NCHW + tiny constants ----
    x_flat = x_nchw.reshape(B, Cin, HW).astype(jnp.float32)

    scale = (gamma / jnp.sqrt(running_var + eps)).astype(jnp.float32)              # [Cout]
    bias = (beta.astype(jnp.float32) - running_mean.astype(jnp.float32) * scale)
    bias = bias.reshape(Cout, 1)

    # fold BN scale into conv weights: scale*(W*x) + bias == (scale*W)*x + bias
    w_folded = weight.astype(jnp.float32) * scale[:, None, None, None]             # [Cout,Cin,3,3]
    w_taps = jnp.transpose(w_folded, (0, 2, 3, 1)).reshape(Cout, 9, Cin)           # [Cout,9,Cin]
    w_mat = jnp.pad(w_taps, ((0, 0), (0, 0), (0, 8 - Cin))).reshape(Cout, K_PAD)   # [Cout,72]

    # per-tap border masks (zero padding), replicated over Cin and tiled over B.
    # Built host-side with numpy -> a compile-time constant, no per-call side computation.
    mask_np = np.zeros((K_PAD, BHW), dtype=np.float32)
    hh = np.arange(H)[:, None]
    ww = np.arange(W)[None, :]
    for kh in range(3):
        for kw in range(3):
            dh, dw = kh - 1, kw - 1
            m = ((hh + dh >= 0) & (hh + dh < H) & (ww + dw >= 0) & (ww + dw < W))
            t = kh * 3 + kw
            mask_np[t * 8:t * 8 + Cin, :] = np.tile(m.reshape(HW).astype(np.float32), B)[None, :]
    masks = jnp.asarray(mask_np)

    kernel = functools.partial(_stem_kernel, H=H, W=W, Cin=Cin, Cout=Cout, B=B)

    out = pl.pallas_call(
        kernel,
        out_shape=jax.ShapeDtypeStruct((B, Cout, HW), jnp.float32),
        grid_spec=pltpu.PrefetchScalarGridSpec(
            num_scalar_prefetch=0,
            grid=(1,),                                            # single invocation (B folded into lanes)
            in_specs=[
                pl.BlockSpec((B, Cin, HW), lambda i: (0, 0, 0)),
                pl.BlockSpec((Cout, K_PAD), lambda i: (0, 0)),
                pl.BlockSpec((K_PAD, BHW), lambda i: (0, 0)),
                pl.BlockSpec((Cout, 1), lambda i: (0, 0)),
            ],
            out_specs=pl.BlockSpec((B, Cout, HW), lambda i: (0, 0, 0)),
            scratch_shapes=[pltpu.VMEM((K_PAD, BHW), jnp.float32)],   # im2col scratch (~144 KiB here)
        ),
        compiler_params=pltpu.CompilerParams(
            dimension_semantics=("arbitrary",),
            vmem_limit_bytes=32 * 1024 * 1024,
        ),
    )(x_flat, w_mat, masks, bias)

    return out.reshape(B, Cout, H, W)            # free reshape back to NCHW


def _reference_forward(x_nchw, weight, gamma, beta, running_mean, running_var, eps=1e-5):
    """Pure-JAX reference (same math) for a correctness sanity check."""
    y = lax.conv_general_dilated(
        x_nchw.astype(jnp.float32), weight.astype(jnp.float32),
        window_strides=(1, 1), padding=((1, 1), (1, 1)),
        dimension_numbers=("NCHW", "OIHW", "NCHW"))
    scale = (gamma / jnp.sqrt(running_var + eps)).reshape(1, -1, 1, 1)
    shift = (beta - running_mean * (gamma / jnp.sqrt(running_var + eps))).reshape(1, -1, 1, 1)
    y = y * scale + shift
    return 0.5 * y * (1.0 + lax.erf(y / jnp.sqrt(2.0)))


if __name__ == "__main__":
    # Small shapes consistent with the module: stem takes RGB (Cin=3) images,
    # conv_filters[0] chosen as 8 output channels; B*H*W = 512 (lane-dense).
    B, Cin, H, W = 2, 3, 16, 16
    Cout = 8

    key = jax.random.PRNGKey(0)
    k_x, k_w, k_g, k_b, k_m, k_v = jax.random.split(key, 6)

    x = jax.random.normal(k_x, (B, Cin, H, W), dtype=jnp.float32)
    weight = jax.random.normal(k_w, (Cout, Cin, 3, 3), dtype=jnp.float32) * 0.1
    gamma = 1.0 + 0.1 * jax.random.normal(k_g, (Cout,), dtype=jnp.float32)
    beta = 0.1 * jax.random.normal(k_b, (Cout,), dtype=jnp.float32)
    running_mean = 0.1 * jax.random.normal(k_m, (Cout,), dtype=jnp.float32)
    running_var = jnp.abs(jax.random.normal(k_v, (Cout,), dtype=jnp.float32)) + 0.5

    out = conv_nxn_bn_forward(x, weight, gamma, beta, running_mean, running_var)
    out = jax.block_until_ready(out)

    ref = _reference_forward(x, weight, gamma, beta, running_mean, running_var)
    assert out.shape == (B, Cout, H, W)
    assert jnp.allclose(out, ref, atol=1e-3, rtol=1e-3), "mismatch vs reference"

    print("KERNEL_OK")
</pallas_src>

<mosaic_0001>
module attributes {stable_mosaic.version = 11 : i64} {
  func.func @_stem_kernel(%arg0: i32, %arg1: memref<2x3x256xf32, #tpu.memory_space<vmem>>, %arg2: memref<8x72xf32, #tpu.memory_space<vmem>>, %arg3: memref<72x512xf32, #tpu.memory_space<vmem>>, %arg4: memref<8x1xf32, #tpu.memory_space<vmem>>, %arg5: memref<2x8x256xf32, #tpu.memory_space<vmem>>, %arg6: memref<72x512xf32, #tpu.memory_space<vmem>>) attributes {dimension_semantics = [#tpu.dimension_semantics<arbitrary>], iteration_bounds = array<i64: 1>, scalar_prefetch = 0 : i64, scratch_operands = 1 : i64, tpu.core_type = #tpu.core_type<tc>, window_params = [{pipeline_mode = #tpu.pipeline_mode<synchronous>, transform_indices = @transform_0, window_bounds = array<i64: 2, 3, 256>}, {pipeline_mode = #tpu.pipeline_mode<synchronous>, transform_indices = @transform_1, window_bounds = array<i64: 8, 72>}, {pipeline_mode = #tpu.pipeline_mode<synchronous>, transform_indices = @transform_2, window_bounds = array<i64: 72, 512>}, {pipeline_mode = #tpu.pipeline_mode<synchronous>, transform_indices = @transform_3, window_bounds = array<i64: 8, 1>}, {pipeline_mode = #tpu.pipeline_mode<synchronous>, transform_indices = @transform_4, window_bounds = array<i64: 2, 8, 256>}]} {
    %c0 = arith.constant 0 : index
    %c0_0 = arith.constant 0 : index
    %c0_1 = arith.constant 0 : index
    %0 = vector.load %arg1[%c0, %c0_0, %c0_1] : memref<2x3x256xf32, #tpu.memory_space<vmem>>, vector<1x3x256xf32>
    %1 = vector.shape_cast %0 : vector<1x3x256xf32> to vector<3x256xf32>
    %c1 = arith.constant 1 : index
    %c0_2 = arith.constant 0 : index
    %c0_3 = arith.constant 0 : index
    %2 = vector.load %arg1[%c1, %c0_2, %c0_3] : memref<2x3x256xf32, #tpu.memory_space<vmem>>, vector<1x3x256xf32>
    %3 = vector.shape_cast %2 : vector<1x3x256xf32> to vector<3x256xf32>
    %4 = tpu.concatenate %1, %3 in 1 : vector<3x256xf32>, vector<3x256xf32> -> vector<3x512xf32>
    %cst = arith.constant 0.000000e+00 : f32
    %5 = vector.broadcast %cst : f32 to vector<72x512xf32>
    %c0_4 = arith.constant 0 : index
    %c0_5 = arith.constant 0 : index
    %6 = vector.load %arg6[%c0_4, %c0_5] : memref<72x512xf32, #tpu.memory_space<vmem>>, vector<72x512xf32>
    tpu.vector_store %arg6[%c0_4, %c0_5], %5 {strides = array<i32>} : memref<72x512xf32, #tpu.memory_space<vmem>>, vector<72x512xf32>,
    %c17_i32 = arith.constant 17 : i32
    %7 = tpu.dynamic_rotate %4 by %c17_i32 dim 1 : vector<3x512xf32>, i32 -> vector<3x512xf32>
    %c0_6 = arith.constant 0 : index
    %c0_7 = arith.constant 0 : index
    %8 = vector.load %arg3[%c0_6, %c0_7] : memref<72x512xf32, #tpu.memory_space<vmem>>, vector<3x512xf32>
    %9 = arith.mulf %7, %8 : vector<3x512xf32>
    %c0_8 = arith.constant 0 : index
    %c0_9 = arith.constant 0 : index
    %10 = vector.load %arg6[%c0_8, %c0_9] : memref<72x512xf32, #tpu.memory_space<vmem>>, vector<3x512xf32>
    tpu.vector_store %arg6[%c0_8, %c0_9], %9 {strides = array<i32>} : memref<72x512xf32, #tpu.memory_space<vmem>>, vector<3x512xf32>,
    %c16_i32 = arith.constant 16 : i32
    %11 = tpu.dynamic_rotate %4 by %c16_i32 dim 1 : vector<3x512xf32>, i32 -> vector<3x512xf32>
    %c8 = arith.constant 8 : index
    %c0_10 = arith.constant 0 : index
    %12 = vector.load %arg3[%c8, %c0_10] : memref<72x512xf32, #tpu.memory_space<vmem>>, vector<3x512xf32>
    %13 = arith.mulf %11, %12 : vector<3x512xf32>
    %c8_11 = arith.constant 8 : index
    %c0_12 = arith.constant 0 : index
    %14 = vector.load %arg6[%c8_11, %c0_12] : memref<72x512xf32, #tpu.memory_space<vmem>>, vector<3x512xf32>
    tpu.vector_store %arg6[%c8_11, %c0_12], %13 {strides = array<i32>} : memref<72x512xf32, #tpu.memory_space<vmem>>, vector<3x512xf32>,
    %c15_i32 = arith.constant 15 : i32
    %15 = tpu.dynamic_rotate %4 by %c15_i32 dim 1 : vector<3x512xf32>, i32 -> vector<3x512xf32>
    %c16 = arith.constant 16 : index
    %c0_13 = arith.constant 0 : index
    %16 = vector.load %arg3[%c16, %c0_13] : memref<72x512xf32, #tpu.memory_space<vmem>>, vector<3x512xf32>
    %17 = arith.mulf %15, %16 : vector<3x512xf32>
    %c16_14 = arith.constant 16 : index
    %c0_15 = arith.constant 0 : index
    %18 = vector.load %arg6[%c16_14, %c0_15] : memref<72x512xf32, #tpu.memory_space<vmem>>, vector<3x512xf32>
    tpu.vector_store %arg6[%c16_14, %c0_15], %17 {strides = array<i32>} : memref<72x512xf32, #tpu.memory_space<vmem>>, vector<3x512xf32>,
    %c1_i32 = arith.constant 1 : i32
    %19 = tpu.dynamic_rotate %4 by %c1_i32 dim 1 : vector<3x512xf32>, i32 -> vector<3x512xf32>
    %c24 = arith.constant 24 : index
    %c0_16 = arith.constant 0 : index
    %20 = vector.load %arg3[%c24, %c0_16] : memref<72x512xf32, #tpu.memory_space<vmem>>, vector<3x512xf32>
    %21 = arith.mulf %19, %20 : vector<3x512xf32>
    %c24_17 = arith.constant 24 : index
    %c0_18 = arith.constant 0 : index
    %22 = vector.load %arg6[%c24_17, %c0_18] : memref<72x512xf32, #tpu.memory_space<vmem>>, vector<3x512xf32>
    tpu.vector_store %arg6[%c24_17, %c0_18], %21 {strides = array<i32>} : memref<72x512xf32, #tpu.memory_space<vmem>>, vector<3x512xf32>,
    %c32 = arith.constant 32 : index
    %c0_19 = arith.constant 0 : index
    %23 = vector.load %arg3[%c32, %c0_19] : memref<72x512xf32, #tpu.memory_space<vmem>>, vector<3x512xf32>
    %24 = arith.mulf %4, %23 : vector<3x512xf32>
    %c32_20 = arith.constant 32 : index
    %c0_21 = arith.constant 0 : index
    %25 = vector.load %arg6[%c32_20, %c0_21] : memref<72x512xf32, #tpu.memory_space<vmem>>, vector<3x512xf32>
    tpu.vector_store %arg6[%c32_20, %c0_21], %24 {strides = array<i32>} : memref<72x512xf32, #tpu.memory_space<vmem>>, vector<3x512xf32>,
    %c511_i32 = arith.constant 511 : i32
    %26 = tpu.dynamic_rotate %4 by %c511_i32 dim 1 : vector<3x512xf32>, i32 -> vector<3x512xf32>
    %c40 = arith.constant 40 : index
    %c0_22 = arith.constant 0 : index
    %27 = vector.load %arg3[%c40, %c0_22] : memref<72x512xf32, #tpu.memory_space<vmem>>, vector<3x512xf32>
    %28 = arith.mulf %26, %27 : vector<3x512xf32>
    %c40_23 = arith.constant 40 : index
    %c0_24 = arith.constant 0 : index
    %29 = vector.load %arg6[%c40_23, %c0_24] : memref<72x512xf32, #tpu.memory_space<vmem>>, vector<3x512xf32>
    tpu.vector_store %arg6[%c40_23, %c0_24], %28 {strides = array<i32>} : memref<72x512xf32, #tpu.memory_space<vmem>>, vector<3x512xf32>,
    %c497_i32 = arith.constant 497 : i32
    %30 = tpu.dynamic_rotate %4 by %c497_i32 dim 1 : vector<3x512xf32>, i32 -> vector<3x512xf32>
    %c48 = arith.constant 48 : index
    %c0_25 = arith.constant 0 : index
    %31 = vector.load %arg3[%c48, %c0_25] : memref<72x512xf32, #tpu.memory_space<vmem>>, vector<3x512xf32>
    %32 = arith.mulf %30, %31 : vector<3x512xf32>
    %c48_26 = arith.constant 48 : index
    %c0_27 = arith.constant 0 : index
    %33 = vector.load %arg6[%c48_26, %c0_27] : memref<72x512xf32, #tpu.memory_space<vmem>>, vector<3x512xf32>
    tpu.vector_store %arg6[%c48_26, %c0_27], %32 {strides = array<i32>} : memref<72x512xf32, #tpu.memory_space<vmem>>, vector<3x512xf32>,
    %c496_i32 = arith.constant 496 : i32
    %34 = tpu.dynamic_rotate %4 by %c496_i32 dim 1 : vector<3x512xf32>, i32 -> vector<3x512xf32>
    %c56 = arith.constant 56 : index
    %c0_28 = arith.constant 0 : index
    %35 = vector.load %arg3[%c56, %c0_28] : memref<72x512xf32, #tpu.memory_space<vmem>>, vector<3x512xf32>
    %36 = arith.mulf %34, %35 : vector<3x512xf32>
    %c56_29 = arith.constant 56 : index
    %c0_30 = arith.constant 0 : index
    %37 = vector.load %arg6[%c56_29, %c0_30] : memref<72x512xf32, #tpu.memory_space<vmem>>, vector<3x512xf32>
    tpu.vector_store %arg6[%c56_29, %c0_30], %36 {strides = array<i32>} : memref<72x512xf32, #tpu.memory_space<vmem>>, vector<3x512xf32>,
    %c495_i32 = arith.constant 495 : i32
    %38 = tpu.dynamic_rotate %4 by %c495_i32 dim 1 : vector<3x512xf32>, i32 -> vector<3x512xf32>
    %c64 = arith.constant 64 : index
    %c0_31 = arith.constant 0 : index
    %39 = vector.load %arg3[%c64, %c0_31] : memref<72x512xf32, #tpu.memory_space<vmem>>, vector<3x512xf32>
    %40 = arith.mulf %38, %39 : vector<3x512xf32>
    %c64_32 = arith.constant 64 : index
    %c0_33 = arith.constant 0 : index
    %41 = vector.load %arg6[%c64_32, %c0_33] : memref<72x512xf32, #tpu.memory_space<vmem>>, vector<3x512xf32>
    tpu.vector_store %arg6[%c64_32, %c0_33], %40 {strides = array<i32>} : memref<72x512xf32, #tpu.memory_space<vmem>>, vector<3x512xf32>,
    %c0_34 = arith.constant 0 : index
    %c0_35 = arith.constant 0 : index
    %42 = vector.load %arg2[%c0_34, %c0_35] : memref<8x72xf32, #tpu.memory_space<vmem>>, vector<8x72xf32>
    %c0_36 = arith.constant 0 : index
    %c0_37 = arith.constant 0 : index
    %43 = vector.load %arg6[%c0_36, %c0_37] : memref<72x512xf32, #tpu.memory_space<vmem>>, vector<72x512xf32>
    %cst_38 = arith.constant dense<0.000000e+00> : vector<8x512xf32>
    %44 = tpu.matmul %42, %43, %cst_38 {dimension_numbers = #tpu.dot_dimension_numbers<[1], [0], [0], [1], [0, 0, 1, 1], [], []>} : vector<8x72xf32>, vector<72x512xf32>, vector<8x512xf32> -> vector<8x512xf32>
    %c0_39 = arith.constant 0 : index
    %c0_40 = arith.constant 0 : index
    %45 = vector.load %arg4[%c0_39, %c0_40] : memref<8x1xf32, #tpu.memory_space<vmem>>, vector<8x1xf32>
    %46 = vector.broadcast %45 : vector<8x1xf32> to vector<8x512xf32>
    %47 = arith.addf %44, %46 : vector<8x512xf32>
    %cst_41 = arith.constant 5.000000e-01 : f32
    %48 = vector.broadcast %cst_41 : f32 to vector<8x512xf32>
    %49 = arith.mulf %48, %47 : vector<8x512xf32>
    %cst_42 = arith.constant 0.707106769 : f32
    %50 = vector.broadcast %cst_42 : f32 to vector<8x512xf32>
    %51 = arith.mulf %47, %50 : vector<8x512xf32>
    %52 = math.erf %51 : vector<8x512xf32>
    %cst_43 = arith.constant 1.000000e+00 : f32
    %53 = vector.broadcast %cst_43 : f32 to vector<8x512xf32>
    %54 = arith.addf %53, %52 : vector<8x512xf32>
    %55 = arith.mulf %49, %54 : vector<8x512xf32>
    %56 = vector.extract_strided_slice %55 {offsets = [0, 0], sizes = [8, 256], strides = [1, 1]} : vector<8x512xf32> to vector<8x256xf32>
    %c0_44 = arith.constant 0 : index
    %c0_45 = arith.constant 0 : index
    %c0_46 = arith.constant 0 : index
    %57 = vector.load %arg5[%c0_44, %c0_45, %c0_46] : memref<2x8x256xf32, #tpu.memory_space<vmem>>, vector<1x8x256xf32>
    %58 = vector.shape_cast %57 : vector<1x8x256xf32> to vector<8x256xf32>
    %59 = vector.shape_cast %56 : vector<8x256xf32> to vector<1x8x256xf32>
    tpu.vector_store %arg5[%c0_44, %c0_45, %c0_46], %59 {strides = array<i32>} : memref<2x8x256xf32, #tpu.memory_space<vmem>>, vector<1x8x256xf32>,
    %60 = vector.extract_strided_slice %55 {offsets = [0, 256], sizes = [8, 256], strides = [1, 1]} : vector<8x512xf32> to vector<8x256xf32>
    %c1_47 = arith.constant 1 : index
    %c0_48 = arith.constant 0 : index
    %c0_49 = arith.constant 0 : index
    %61 = vector.load %arg5[%c1_47, %c0_48, %c0_49] : memref<2x8x256xf32, #tpu.memory_space<vmem>>, vector<1x8x256xf32>
    %62 = vector.shape_cast %61 : vector<1x8x256xf32> to vector<8x256xf32>
    %63 = vector.shape_cast %60 : vector<8x256xf32> to vector<1x8x256xf32>
    tpu.vector_store %arg5[%c1_47, %c0_48, %c0_49], %63 {strides = array<i32>} : memref<2x8x256xf32, #tpu.memory_space<vmem>>, vector<1x8x256xf32>,
    return
  }
  func.func @transform_0(%arg0: i32) -> (i32, i32, i32) {
    %c0_i32 = arith.constant 0 : i32
    %c0_i32_0 = arith.constant 0 : i32
    %c0_i32_1 = arith.constant 0 : i32
    %c0_i32_2 = arith.constant 0 : i32
    return %c0_i32, %c0_i32_0, %c0_i32_1 : i32, i32, i32
  }
  func.func @transform_1(%arg0: i32) -> (i32, i32) {
    %c0_i32 = arith.constant 0 : i32
    %c0_i32_0 = arith.constant 0 : i32
    %c0_i32_1 = arith.constant 0 : i32
    return %c0_i32, %c0_i32_0 : i32, i32
  }
  func.func @transform_2(%arg0: i32) -> (i32, i32) {
    %c0_i32 = arith.constant 0 : i32
    %c0_i32_0 = arith.constant 0 : i32
    %c0_i32_1 = arith.constant 0 : i32
    return %c0_i32, %c0_i32_0 : i32, i32
  }
  func.func @transform_3(%arg0: i32) -> (i32, i32) {
    %c0_i32 = arith.constant 0 : i32
    %c0_i32_0 = arith.constant 0 : i32
    %c0_i32_1 = arith.constant 0 : i32
    return %c0_i32, %c0_i32_0 : i32, i32
  }
  func.func @transform_4(%arg0: i32) -> (i32, i32, i32) {
    %c0_i32 = arith.constant 0 : i32
    %c0_i32_0 = arith.constant 0 : i32
    %c0_i32_1 = arith.constant 0 : i32
    %c0_i32_2 = arith.constant 0 : i32
    return %c0_i32, %c0_i32_0, %c0_i32_1 : i32, i32, i32
  }
}

</mosaic_0001>

<llo_original>
// kernel: tpu_custom_call.1
$region0: #{tpu_custom_call.1}
  #allocation0 [shape = 'u32[]', space=smem, size = 0x4, offset = 0x4, fixed_abs, tag = 'smem constant byte address 0x4 - core index']
  #allocation1 [shape = 'u32[144,128]{1,0:T(1,128)}', space=vmem, size = 0x12000, scoped, tag = 'internal scratch']
  #allocation2 [shape = 'f32[72,512]{1,0:T(8,128)}', space=vmem, size = 0x24000, scoped, tag = 'scratch operand']
  %s0 = inlined_call_operand.vmem [shape: f32[2,3,256], index: 0, kind: input, shape index: {}]
  %s1 = inlined_call_operand.vmem [shape: f32[8,72], index: 1, kind: input, shape index: {}]
  %s2 = inlined_call_operand.hbm [shape: f32[72,512], index: 2, kind: input, shape index: {}]
  %s3 = inlined_call_operand.vmem [shape: f32[8,1], index: 3, kind: input, shape index: {}]
  %s4 = inlined_call_operand.hbm [shape: f32[2,8,256], index: 4, kind: output, shape index: {}]
  %s5 = sld [smem:[#allocation0]]
  $region30: #{tpu_custom_call.1} parent=0
    _
  %s7 = ssub.s32 1, %s5
  %s8 = scalar_select 0, %s7, %s5
  $region1: #{tpu_custom_call.1} parent=0
    #allocation3 [shape = 'u8[147456]{0}', space=vmem, size = 0x24000, scoped, tag = 'input window, operand 2, single buffered']
    #allocation4 [shape = 's32[1]{0}', space=sflag, size = 0x4, scoped, tag = 'scoped memory for tpu_custom_call.1']
    #allocation5 [shape = 's32[1]{0}', space=sflag, size = 0x4, scoped, tag = 'scoped memory for tpu_custom_call.1']
    #allocation6 [shape = 'u8[16384]{0}', space=vmem, size = 0x4000, scoped, tag = 'output window, operand 0, single buffered']
    %9 = vsyncpa [#allocation4], 0
    %10 = vsyncpa [#allocation5], 0
    // Predicated region
    $region2: #{tpu_custom_call.1} parent=1 // pred_check
      _
    $region3: #{tpu_custom_call.1} parent=1 // pred_check_branch
      %12 = sbr.rel (0) target = $region5
    $region4: #{tpu_custom_call.1} parent=1 // pred_region
      _
    $region5: #{tpu_custom_call.1} parent=1 // pred_fallthru
      _
    // Predicated region
    $region6: #{tpu_custom_call.1} parent=1 // pred_check
      _
    $region7: #{tpu_custom_call.1} parent=1 // pred_check_branch
      %14 = sbr.rel (0) target = $region9
    $region8: #{tpu_custom_call.1} parent=1 // pred_region
      _
    $region9: #{tpu_custom_call.1} parent=1 // pred_fallthru
      _
    // Predicated region
    $region10: #{tpu_custom_call.1} parent=1 // pred_check
      _
    $region11: #{tpu_custom_call.1} parent=1 // pred_check_branch
      %16 = sbr.rel (0) target = $region13
    $region12: #{tpu_custom_call.1} parent=1 // pred_region
      %s18 = ssub.s32 4608, 4608
      %19 = vsyncadd [#allocation4], %s18
      %s20 = sshll.u32 [#allocation3], 4
      %s21 = int_to_ptr.vmem [resolvable:$true] %s20
      %26 = dma.hbm_to_vmem [thread:$0]  %s2, 4608, %s21, [#allocation4], 512, 512, 32
    $region13: #{tpu_custom_call.1} parent=1 // pred_fallthru
      _
    // Predicated region
    $region14: #{tpu_custom_call.1} parent=1 // pred_check
      _
    $region15: #{tpu_custom_call.1} parent=1 // pred_check_branch
      %28 = sbr.rel (0) target = $region17
    $region16: #{tpu_custom_call.1} parent=1 // pred_region
      _
    $region17: #{tpu_custom_call.1} parent=1 // pred_fallthru
      _
    // Predicated region
    $region18: #{tpu_custom_call.1} parent=1 // pred_check
      _
    $region19: #{tpu_custom_call.1} parent=1 // pred_check_branch
      %30 = sbr.rel (0) target = $region21
    $region20: #{tpu_custom_call.1} parent=1 // pred_region
      %31 = dma.done [#allocation4], 4608
    $region21: #{tpu_custom_call.1} parent=1 // pred_fallthru
      _
    %v32 = vld [vmem:[%s0] sm:$0x77]
    %s33 = scalar_lea.vmem %s0, 8
    %v34 = vld [vmem:[%s33] sm:$0x77]
    %v36 = vcombine.high %v32, %v32
    %v39 = vcombine.high %v34, %v34
    %41 = vst [vmem:[#allocation2] sm:$0xff] 0.0
    %42 = vst [vmem:[#allocation2 + $0x8] sm:$0xff] 0.0
    %43 = vst [vmem:[#allocation2 + $0x10] sm:$0xff] 0.0
    %44 = vst [vmem:[#allocation2 + $0x18] sm:$0xff] 0.0
    %45 = vst [vmem:[#allocation2 + $0x20] sm:$0xff] 0.0
    %46 = vst [vmem:[#allocation2 + $0x28] sm:$0xff] 0.0
    %47 = vst [vmem:[#allocation2 + $0x30] sm:$0xff] 0.0
    %48 = vst [vmem:[#allocation2 + $0x38] sm:$0xff] 0.0
    %49 = vst [vmem:[#allocation2 + $0x40] sm:$0xff] 0.0
    %50 = vst [vmem:[#allocation2 + $0x48] sm:$0xff] 0.0
    %51 = vst [vmem:[#allocation2 + $0x50] sm:$0xff] 0.0
    %52 = vst [vmem:[#allocation2 + $0x58] sm:$0xff] 0.0
    %53 = vst [vmem:[#allocation2 + $0x60] sm:$0xff] 0.0
    %54 = vst [vmem:[#allocation2 + $0x68] sm:$0xff] 0.0
    %55 = vst [vmem:[#allocation2 + $0x70] sm:$0xff] 0.0
    %56 = vst [vmem:[#allocation2 + $0x78] sm:$0xff] 0.0
    %57 = vst [vmem:[#allocation2 + $0x80] sm:$0xff] 0.0
    %58 = vst [vmem:[#allocation2 + $0x88] sm:$0xff] 0.0
    %59 = vst [vmem:[#allocation2 + $0x90] sm:$0xff] 0.0
    %60 = vst [vmem:[#allocation2 + $0x98] sm:$0xff] 0.0
    %61 = vst [vmem:[#allocation2 + $0xa0] sm:$0xff] 0.0
    %62 = vst [vmem:[#allocation2 + $0xa8] sm:$0xff] 0.0
    %63 = vst [vmem:[#allocation2 + $0xb0] sm:$0xff] 0.0
    %64 = vst [vmem:[#allocation2 + $0xb8] sm:$0xff] 0.0
    %65 = vst [vmem:[#allocation2 + $0xc0] sm:$0xff] 0.0
    %66 = vst [vmem:[#allocation2 + $0xc8] sm:$0xff] 0.0
    %67 = vst [vmem:[#allocation2 + $0xd0] sm:$0xff] 0.0
    %68 = vst [vmem:[#allocation2 + $0xd8] sm:$0xff] 0.0
    %69 = vst [vmem:[#allocation2 + $0xe0] sm:$0xff] 0.0
    %70 = vst [vmem:[#allocation2 + $0xe8] sm:$0xff] 0.0
    %71 = vst [vmem:[#allocation2 + $0xf0] sm:$0xff] 0.0
    %72 = vst [vmem:[#allocation2 + $0xf8] sm:$0xff] 0.0
    %73 = vst [vmem:[#allocation2 + $0x100] sm:$0xff] 0.0
    %74 = vst [vmem:[#allocation2 + $0x108] sm:$0xff] 0.0
    %75 = vst [vmem:[#allocation2 + $0x110] sm:$0xff] 0.0
    %76 = vst [vmem:[#allocation2 + $0x118] sm:$0xff] 0.0
    %77 = vrot.lane.b32.xlu0 %v32, 17
    %v78 = vpop.permute.xlu0 %77
    %79 = vrot.lane.b32.xlu0 %v36, 17
    %v80 = vpop.permute.xlu0 %79
    %81 = vrot.lane.b32.xlu0 %v34, 17
    %v82 = vpop.permute.xlu0 %81
    %83 = vrot.lane.b32.xlu0 %v39, 17
    %v84 = vpop.permute.xlu0 %83
    %v85 = vlaneseq
    %v86 = vand.u32 %v85, 127
    %vm87 = vcmp.lt.s32.totalorder %v86, 17
    %v88 = vsel %vm87, %v82, %v84
    %v89 = vsel %vm87, %v80, %v82
    %v90 = vsel %vm87, %v78, %v80
    %v91 = vsel %vm87, %v84, %v78
    %v92 = vld [vmem:[#allocation3] sm:$0x7]
    %v93 = vld [vmem:[#allocation3 + $0x8] sm:$0x7]
    %v94 = vld [vmem:[#allocation3 + $0x10] sm:$0x7]
    %v95 = vld [vmem:[#allocation3 + $0x18] sm:$0x7]
    %v96 = vmul.f32 %v91, %v92
    %v97 = vmul.f32 %v90, %v93
    %v98 = vmul.f32 %v89, %v94
    %v99 = vmul.f32 %v88, %v95
    %100 = vst [vmem:[#allocation2] sm:$0x7] %v96
    %101 = vst [vmem:[#allocation2 + $0x8] sm:$0x7] %v97
    %102 = vst [vmem:[#allocation2 + $0x10] sm:$0x7] %v98
    %103 = vst [vmem:[#allocation2 + $0x18] sm:$0x7] %v99
    %104 = vrot.lane.b32.xlu0 %v32, 16
    %v105 = vpop.permute.xlu0 %104
    %106 = vrot.lane.b32.xlu0 %v36, 16
    %v107 = vpop.permute.xlu0 %106
    %108 = vrot.lane.b32.xlu0 %v34, 16
    %v109 = vpop.permute.xlu0 %108
    %110 = vrot.lane.b32.xlu0 %v39, 16
    %v111 = vpop.permute.xlu0 %110
    %vm112 = vcmp.lt.s32.totalorder %v86, 16
    %v113 = vsel %vm112, %v109, %v111
    %v114 = vsel %vm112, %v107, %v109
    %v115 = vsel %vm112, %v105, %v107
    %v116 = vsel %vm112, %v111, %v105
    %v117 = vld [vmem:[#allocation3 + $0x20] sm:$0x7]
    %v118 = vld [vmem:[#allocation3 + $0x28] sm:$0x7]
    %v119 = vld [vmem:[#allocation3 + $0x30] sm:$0x7]
    %v120 = vld [vmem:[#allocation3 + $0x38] sm:$0x7]
    %v121 = vmul.f32 %v116, %v117
    %v122 = vmul.f32 %v115, %v118
    %v123 = vmul.f32 %v114, %v119
    %v124 = vmul.f32 %v113, %v120
    %125 = vst [vmem:[#allocation2 + $0x20] sm:$0x7] %v121
    %126 = vst [vmem:[#allocation2 + $0x28] sm:$0x7] %v122
    %127 = vst [vmem:[#allocation2 + $0x30] sm:$0x7] %v123
    %128 = vst [vmem:[#allocation2 + $0x38] sm:$0x7] %v124
    %129 = vrot.lane.b32.xlu0 %v32, 15
    %v130 = vpop.permute.xlu0 %129
    %131 = vrot.lane.b32.xlu0 %v36, 15
    %v132 = vpop.permute.xlu0 %131
    %133 = vrot.lane.b32.xlu0 %v34, 15
    %v134 = vpop.permute.xlu0 %133
    %135 = vrot.lane.b32.xlu0 %v39, 15
    %v136 = vpop.permute.xlu0 %135
    %vm137 = vcmp.lt.s32.totalorder %v86, 15
    %v138 = vsel %vm137, %v134, %v136
    %v139 = vsel %vm137, %v132, %v134
    %v140 = vsel %vm137, %v130, %v132
    %v141 = vsel %vm137, %v136, %v130
    %v142 = vld [vmem:[#allocation3 + $0x40] sm:$0x7]
    %v143 = vld [vmem:[#allocation3 + $0x48] sm:$0x7]
    %v144 = vld [vmem:[#allocation3 + $0x50] sm:$0x7]
    %v145 = vld [vmem:[#allocation3 + $0x58] sm:$0x7]
    %v146 = vmul.f32 %v141, %v142
    %v147 = vmul.f32 %v140, %v143
    %v148 = vmul.f32 %v139, %v144
    %v149 = vmul.f32 %v138, %v145
    %150 = vst [vmem:[#allocation2 + $0x40] sm:$0x7] %v146
    %151 = vst [vmem:[#allocation2 + $0x48] sm:$0x7] %v147
    %152 = vst [vmem:[#allocation2 + $0x50] sm:$0x7] %v148
    %153 = vst [vmem:[#allocation2 + $0x58] sm:$0x7] %v149
    %154 = vrot.lane.b32.xlu0 %v32, 1
    %v155 = vpop.permute.xlu0 %154
    %156 = vrot.lane.b32.xlu0 %v36, 1
    %v157 = vpop.permute.xlu0 %156
    %158 = vrot.lane.b32.xlu0 %v34, 1
    %v159 = vpop.permute.xlu0 %158
    %160 = vrot.lane.b32.xlu0 %v39, 1
    %v161 = vpop.permute.xlu0 %160
    %vm162 = vcmp.lt.s32.totalorder %v86, 1
    %v163 = vsel %vm162, %v159, %v161
    %v164 = vsel %vm162, %v157, %v159
    %v165 = vsel %vm162, %v155, %v157
    %v166 = vsel %vm162, %v161, %v155
    %v167 = vld [vmem:[#allocation3 + $0x60] sm:$0x7]
    %v168 = vld [vmem:[#allocation3 + $0x68] sm:$0x7]
    %v169 = vld [vmem:[#allocation3 + $0x70] sm:$0x7]
    %v170 = vld [vmem:[#allocation3 + $0x78] sm:$0x7]
    %v171 = vmul.f32 %v166, %v167
    %v172 = vmul.f32 %v165, %v168
    %v173 = vmul.f32 %v164, %v169
    %v174 = vmul.f32 %v163, %v170
    %175 = vst [vmem:[#allocation2 + $0x60] sm:$0x7] %v171
    %176 = vst [vmem:[#allocation2 + $0x68] sm:$0x7] %v172
    %177 = vst [vmem:[#allocation2 + $0x70] sm:$0x7] %v173
    %178 = vst [vmem:[#allocation2 + $0x78] sm:$0x7] %v174
    %v179 = vld [vmem:[#allocation3 + $0x80] sm:$0x7]
    %v180 = vld [vmem:[#allocation3 + $0x88] sm:$0x7]
    %v181 = vld [vmem:[#allocation3 + $0x90] sm:$0x7]
    %v182 = vld [vmem:[#allocation3 + $0x98] sm:$0x7]
    %v183 = vmul.f32 %v32, %v179
    %v184 = vmul.f32 %v36, %v180
    %v185 = vmul.f32 %v34, %v181
    %v186 = vmul.f32 %v39, %v182
    %187 = vst [vmem:[#allocation2 + $0x80] sm:$0x7] %v183
    %188 = vst [vmem:[#allocation2 + $0x88] sm:$0x7] %v184
    %189 = vst [vmem:[#allocation2 + $0x90] sm:$0x7] %v185
    %190 = vst [vmem:[#allocation2 + $0x98] sm:$0x7] %v186
    %191 = vrot.lane.b32.xlu0 %v32, 127
    %v192 = vpop.permute.xlu0 %191
    %193 = vrot.lane.b32.xlu0 %v36, 127
    %v194 = vpop.permute.xlu0 %193
    %195 = vrot.lane.b32.xlu0 %v34, 127
    %v196 = vpop.permute.xlu0 %195
    %197 = vrot.lane.b32.xlu0 %v39, 127
    %v198 = vpop.permute.xlu0 %197
    %vm199 = vcmp.lt.s32.totalorder %v86, 127
    %v200 = vsel %vm199, %v196, %v198
    %v201 = vsel %vm199, %v194, %v196
    %v202 = vsel %vm199, %v192, %v194
    %v203 = vsel %vm199, %v198, %v192
    %v204 = vld [vmem:[#allocation3 + $0xa0] sm:$0x7]
    %v205 = vld [vmem:[#allocation3 + $0xa8] sm:$0x7]
    %v206 = vld [vmem:[#allocation3 + $0xb0] sm:$0x7]
    %v207 = vld [vmem:[#allocation3 + $0xb8] sm:$0x7]
    %v208 = vmul.f32 %v202, %v204
    %v209 = vmul.f32 %v201, %v205
    %v210 = vmul.f32 %v200, %v206
    %v211 = vmul.f32 %v203, %v207
    %212 = vst [vmem:[#allocation2 + $0xa0] sm:$0x7] %v208
    %213 = vst [vmem:[#allocation2 + $0xa8] sm:$0x7] %v209
    %214 = vst [vmem:[#allocation2 + $0xb0] sm:$0x7] %v210
    %215 = vst [vmem:[#allocation2 + $0xb8] sm:$0x7] %v211
    %216 = vrot.lane.b32.xlu0 %v32, 113
    %v217 = vpop.permute.xlu0 %216
    %218 = vrot.lane.b32.xlu0 %v36, 113
    %v219 = vpop.permute.xlu0 %218
    %220 = vrot.lane.b32.xlu0 %v34, 113
    %v221 = vpop.permute.xlu0 %220
    %222 = vrot.lane.b32.xlu0 %v39, 113
    %v223 = vpop.permute.xlu0 %222
    %vm224 = vcmp.lt.s32.totalorder %v86, 113
    %v225 = vsel %vm224, %v221, %v223
    %v226 = vsel %vm224, %v219, %v221
    %v227 = vsel %vm224, %v217, %v219
    %v228 = vsel %vm224, %v223, %v217
    %v229 = vld [vmem:[#allocation3 + $0xc0] sm:$0x7]
    %v230 = vld [vmem:[#allocation3 + $0xc8] sm:$0x7]
    %v231 = vld [vmem:[#allocation3 + $0xd0] sm:$0x7]
    %v232 = vld [vmem:[#allocation3 + $0xd8] sm:$0x7]
    %v233 = vmul.f32 %v227, %v229
    %v234 = vmul.f32 %v226, %v230
    %v235 = vmul.f32 %v225, %v231
    %v236 = vmul.f32 %v228, %v232
    %237 = vst [vmem:[#allocation2 + $0xc0] sm:$0x7] %v233
    %238 = vst [vmem:[#allocation2 + $0xc8] sm:$0x7] %v234
    %239 = vst [vmem:[#allocation2 + $0xd0] sm:$0x7] %v235
    %240 = vst [vmem:[#allocation2 + $0xd8] sm:$0x7] %v236
    %241 = vrot.lane.b32.xlu0 %v32, 112
    %v242 = vpop.permute.xlu0 %241
    %243 = vrot.lane.b32.xlu0 %v36, 112
    %v244 = vpop.permute.xlu0 %243
    %245 = vrot.lane.b32.xlu0 %v34, 112
    %v246 = vpop.permute.xlu0 %245
    %247 = vrot.lane.b32.xlu0 %v39, 112
    %v248 = vpop.permute.xlu0 %247
    %vm249 = vcmp.lt.s32.totalorder %v86, 112
    %v250 = vsel %vm249, %v246, %v248
    %v251 = vsel %vm249, %v244, %v246
    %v252 = vsel %vm249, %v242, %v244
    %v253 = vsel %vm249, %v248, %v242
    %v254 = vld [vmem:[#allocation3 + $0xe0] sm:$0x7]
    %v255 = vld [vmem:[#allocation3 + $0xe8] sm:$0x7]
    %v256 = vld [vmem:[#allocation3 + $0xf0] sm:$0x7]
    %v257 = vld [vmem:[#allocation3 + $0xf8] sm:$0x7]
    %v258 = vmul.f32 %v252, %v254
    %v259 = vmul.f32 %v251, %v255
    %v260 = vmul.f32 %v250, %v256
    %v261 = vmul.f32 %v253, %v257
    %262 = vst [vmem:[#allocation2 + $0xe0] sm:$0x7] %v258
    %263 = vst [vmem:[#allocation2 + $0xe8] sm:$0x7] %v259
    %264 = vst [vmem:[#allocation2 + $0xf0] sm:$0x7] %v260
    %265 = vst [vmem:[#allocation2 + $0xf8] sm:$0x7] %v261
    %266 = vrot.lane.b32.xlu0 %v32, 111
    %v267 = vpop.permute.xlu0 %266
    %268 = vrot.lane.b32.xlu0 %v36, 111
    %v269 = vpop.permute.xlu0 %268
    %270 = vrot.lane.b32.xlu0 %v34, 111
    %v271 = vpop.permute.xlu0 %270
    %272 = vrot.lane.b32.xlu0 %v39, 111
    %v273 = vpop.permute.xlu0 %272
    %vm274 = vcmp.lt.s32.totalorder %v86, 111
    %v275 = vsel %vm274, %v271, %v273
    %v276 = vsel %vm274, %v269, %v271
    %v277 = vsel %vm274, %v267, %v269
    %v278 = vsel %vm274, %v273, %v267
    %v279 = vld [vmem:[#allocation3 + $0x100] sm:$0x7]
    %v280 = vld [vmem:[#allocation3 + $0x108] sm:$0x7]
    %v281 = vld [vmem:[#allocation3 + $0x110] sm:$0x7]
    %v282 = vld [vmem:[#allocation3 + $0x118] sm:$0x7]
    %v283 = vmul.f32 %v277, %v279
    %v284 = vmul.f32 %v276, %v280
    %v285 = vmul.f32 %v275, %v281
    %v286 = vmul.f32 %v278, %v282
    %287 = vst [vmem:[#allocation2 + $0x100] sm:$0x7] %v283
    %288 = vst [vmem:[#allocation2 + $0x108] sm:$0x7] %v284
    %289 = vst [vmem:[#allocation2 + $0x110] sm:$0x7] %v285
    %290 = vst [vmem:[#allocation2 + $0x118] sm:$0x7] %v286
    %v291 = vld [vmem:[%s1] sm:$0xff]
    %v292 = vld [vmem:[#allocation2] sm:$0xff]
    %v293 = vld [vmem:[#allocation2 + $0x8] sm:$0xff]
    %v294 = vld [vmem:[#allocation2 + $0x10] sm:$0xff]
    %v295 = vld [vmem:[#allocation2 + $0x18] sm:$0xff]
    %v296 = vld [vmem:[#allocation2 + $0x20] sm:$0xff]
    %v297 = vld [vmem:[#allocation2 + $0x28] sm:$0xff]
    %v298 = vld [vmem:[#allocation2 + $0x30] sm:$0xff]
    %v299 = vld [vmem:[#allocation2 + $0x38] sm:$0xff]
    %v300 = vld [vmem:[#allocation2 + $0x40] sm:$0xff]
    %v301 = vld [vmem:[#allocation2 + $0x48] sm:$0xff]
    %v302 = vld [vmem:[#allocation2 + $0x50] sm:$0xff]
    %v303 = vld [vmem:[#allocation2 + $0x58] sm:$0xff]
    %v304 = vld [vmem:[#allocation2 + $0x60] sm:$0xff]
    %v305 = vld [vmem:[#allocation2 + $0x68] sm:$0xff]
    %v306 = vld [vmem:[#allocation2 + $0x70] sm:$0xff]
    %v307 = vld [vmem:[#allocation2 + $0x78] sm:$0xff]
    %v308 = vld [vmem:[#allocation2 + $0x80] sm:$0xff]
    %v309 = vld [vmem:[#allocation2 + $0x88] sm:$0xff]
    %v310 = vld [vmem:[#allocation2 + $0x90] sm:$0xff]
    %v311 = vld [vmem:[#allocation2 + $0x98] sm:$0xff]
    %v312 = vld [vmem:[#allocation2 + $0xa0] sm:$0xff]
    %v313 = vld [vmem:[#allocation2 + $0xa8] sm:$0xff]
    %v314 = vld [vmem:[#allocation2 + $0xb0] sm:$0xff]
    %v315 = vld [vmem:[#allocation2 + $0xb8] sm:$0xff]
    %v316 = vld [vmem:[#allocation2 + $0xc0] sm:$0xff]
    %v317 = vld [vmem:[#allocation2 + $0xc8] sm:$0xff]
    %v318 = vld [vmem:[#allocation2 + $0xd0] sm:$0xff]
    %v319 = vld [vmem:[#allocation2 + $0xd8] sm:$0xff]
    %v320 = vld [vmem:[#allocation2 + $0xe0] sm:$0xff]
    %v321 = vld [vmem:[#allocation2 + $0xe8] sm:$0xff]
    %v322 = vld [vmem:[#allocation2 + $0xf0] sm:$0xff]
    %v323 = vld [vmem:[#allocation2 + $0xf8] sm:$0xff]
    %v324 = vld [vmem:[#allocation2 + $0x100] sm:$0xff]
    %v325 = vld [vmem:[#allocation2 + $0x108] sm:$0xff]
    %v326 = vld [vmem:[#allocation2 + $0x110] sm:$0xff]
    %v327 = vld [vmem:[#allocation2 + $0x118] sm:$0xff]
    %v328 = vld [vmem:[%s3] sm:$0xff]
    %330 = vset.pattern.permute.xlu0 0
    %331 = vperm.xlu0 %330, %v328
    %v332 = vpop.permute.xlu0 %331
    %vm334 = vcmask 588800
    %v336 = vsel %vm334, %v291, 0
    %338 = vmatprep.subr.mxu0 0.0
    %339 = vmatpush1.msra.mxu0 0.0
    %340 = vmatprep.subr.mxu0 0.0
    %341 = vmatpush1.msra.mxu0 0.0
    %342 = vmatprep.subr.mxu0 0.0
    %343 = vmatpush1.msra.mxu0 0.0
    %344 = vmatprep.subr.mxu0 0.0
    %345 = vmatpush1.msra.mxu0 0.0
    %346 = vmatprep.subr.mxu0 0.0
    %347 = vmatpush1.msra.mxu0 0.0
    %348 = vmatprep.subr.mxu0 0.0
    %349 = vmatpush1.msra.mxu0 0.0
    %350 = vmatprep.subr.mxu0 0.0
    %351 = vmatpush1.msra.mxu0 0.0
    %352 = vmatprep.subr.mxu0 %v325
    %353 = vmatpush1.msra.mxu0 %v324
    %354 = vmatprep.subr.mxu0 %v321
    %355 = vmatpush1.msra.mxu0 %v320
    %356 = vmatprep.subr.mxu0 %v317
    %357 = vmatpush1.msra.mxu0 %v316
    %358 = vmatprep.subr.mxu0 %v313
    %359 = vmatpush1.msra.mxu0 %v312
    %360 = vmatprep.subr.mxu0 %v309
    %361 = vmatpush1.msra.mxu0 %v308
    %362 = vmatprep.subr.mxu0 %v305
    %363 = vmatpush1.msra.mxu0 %v304
    %364 = vmatprep.subr.mxu0 %v301
    %365 = vmatpush1.msra.mxu0 %v300
    %366 = vmatprep.subr.mxu0 %v297
    %367 = vmatpush1.msra.mxu0 %v296
    %368 = vmatprep.subr.mxu0 %v293
    %369 = vmatpush1.msra.mxu0 %v292
    %370 = vmatprep.subr.mxu0 0.0
    %371 = vmatpush2.msra.mxu0 0.0
    %372 = vmatprep.subr.mxu0 0.0
    %373 = vmatpush2.msra.mxu0 0.0
    %374 = vmatprep.subr.mxu0 0.0
    %375 = vmatpush2.msra.mxu0 0.0
    %376 = vmatprep.subr.mxu0 0.0
    %377 = vmatpush2.msra.mxu0 0.0
    %378 = vmatprep.subr.mxu0 0.0
    %379 = vmatpush2.msra.mxu0 0.0
    %380 = vmatprep.subr.mxu0 0.0
    %381 = vmatpush2.msra.mxu0 0.0
    %382 = vmatprep.subr.mxu0 0.0
    %383 = vmatpush2.msra.mxu0 0.0
    %384 = vmatprep.subr.mxu0 0.0
    %385 = vmatpush2.msra.mxu0 0.0
    %386 = vmatprep.subr.mxu0 0.0
    %387 = vmatpush2.msra.mxu0 0.0
    %388 = vmatprep.subr.mxu0 0.0
    %389 = vmatpush2.msra.mxu0 0.0
    %390 = vmatprep.subr.mxu0 0.0
    %391 = vmatpush2.msra.mxu0 0.0
    %392 = vmatprep.subr.mxu0 0.0
    %393 = vmatpush2.msra.mxu0 0.0
    %394 = vmatprep.subr.mxu0 0.0
    %395 = vmatpush2.msra.mxu0 0.0
    %396 = vmatprep.subr.mxu0 0.0
    %397 = vmatpush2.msra.mxu0 0.0
    %398 = vmatprep.subr.mxu0 0.0
    %399 = vmatpush2.msra.mxu0 0.0
    %400 = vmatprep.subr.mxu0 0.0
    %401 = vmatpush2.msra.mxu0 0.0
    %402 = vmatprep.mubr.f32.mxu0 0.0
    %403 = vmatmul.mubr.f32.gmra.mxu0 %v336
    %v404 = vpop.f32.mrf.mxu0
    %v405 = vadd.f32 %v332, %v404
    %v406 = vpop.f32.mrf.mxu0
    %v407 = vadd.f32 %v332, %v406
    %408 = vdwg.mxu0
    %409 = vmatprep.subr.mxu0 0.0
    %410 = vmatpush1.msra.mxu0 0.0
    %411 = vmatprep.subr.mxu0 0.0
    %412 = vmatpush1.msra.mxu0 0.0
    %413 = vmatprep.subr.mxu0 0.0
    %414 = vmatpush1.msra.mxu0 0.0
    %415 = vmatprep.subr.mxu0 0.0
    %416 = vmatpush1.msra.mxu0 0.0
    %417 = vmatprep.subr.mxu0 0.0
    %418 = vmatpush1.msra.mxu0 0.0
    %419 = vmatprep.subr.mxu0 0.0
    %420 = vmatpush1.msra.mxu0 0.0
    %421 = vmatprep.subr.mxu0 0.0
    %422 = vmatpush1.msra.mxu0 0.0
    %423 = vmatprep.subr.mxu0 %v327
    %424 = vmatpush1.msra.mxu0 %v326
    %425 = vmatprep.subr.mxu0 %v323
    %426 = vmatpush1.msra.mxu0 %v322
    %427 = vmatprep.subr.mxu0 %v319
    %428 = vmatpush1.msra.mxu0 %v318
    %429 = vmatprep.subr.mxu0 %v315
    %430 = vmatpush1.msra.mxu0 %v314
    %431 = vmatprep.subr.mxu0 %v311
    %432 = vmatpush1.msra.mxu0 %v310
    %433 = vmatprep.subr.mxu0 %v307
    %434 = vmatpush1.msra.mxu0 %v306
    %435 = vmatprep.subr.mxu0 %v303
    %436 = vmatpush1.msra.mxu0 %v302
    %437 = vmatprep.subr.mxu0 %v299
    %438 = vmatpush1.msra.mxu0 %v298
    %439 = vmatprep.subr.mxu0 %v295
    %440 = vmatpush1.msra.mxu0 %v294
    %441 = vmatprep.subr.mxu0 0.0
    %442 = vmatpush2.msra.mxu0 0.0
    %443 = vmatprep.subr.mxu0 0.0
    %444 = vmatpush2.msra.mxu0 0.0
    %445 = vmatprep.subr.mxu0 0.0
    %446 = vmatpush2.msra.mxu0 0.0
    %447 = vmatprep.subr.mxu0 0.0
    %448 = vmatpush2.msra.mxu0 0.0
    %449 = vmatprep.subr.mxu0 0.0
    %450 = vmatpush2.msra.mxu0 0.0
    %451 = vmatprep.subr.mxu0 0.0
    %452 = vmatpush2.msra.mxu0 0.0
    %453 = vmatprep.subr.mxu0 0.0
    %454 = vmatpush2.msra.mxu0 0.0
    %455 = vmatprep.subr.mxu0 0.0
    %456 = vmatpush2.msra.mxu0 0.0
    %457 = vmatprep.subr.mxu0 0.0
    %458 = vmatpush2.msra.mxu0 0.0
    %459 = vmatprep.subr.mxu0 0.0
    %460 = vmatpush2.msra.mxu0 0.0
    %461 = vmatprep.subr.mxu0 0.0
    %462 = vmatpush2.msra.mxu0 0.0
    %463 = vmatprep.subr.mxu0 0.0
    %464 = vmatpush2.msra.mxu0 0.0
    %465 = vmatprep.subr.mxu0 0.0
    %466 = vmatpush2.msra.mxu0 0.0
    %467 = vmatprep.subr.mxu0 0.0
    %468 = vmatpush2.msra.mxu0 0.0
    %469 = vmatprep.subr.mxu0 0.0
    %470 = vmatpush2.msra.mxu0 0.0
    %471 = vmatprep.subr.mxu0 0.0
    %472 = vmatpush2.msra.mxu0 0.0
    %473 = vmatprep.mubr.f32.mxu0 0.0
    %474 = vmatmul.mubr.f32.gmra.mxu0 %v336
    %v475 = vpop.f32.mrf.mxu0
    %v476 = vadd.f32 %v332, %v475
    %v477 = vpop.f32.mrf.mxu0
    %v478 = vadd.f32 %v332, %v477
    %479 = vdwg.mxu0
    %v480 = vmul.f32 %v405, 0.5
    %v481 = vmul.f32 %v407, 0.5
    %v482 = vmul.f32 %v476, 0.5
    %v483 = vmul.f32 %v478, 0.5
    %v484 = vmul.f32 %v405, 0.70710677
    %v485 = vmul.f32 %v407, 0.70710677
    %v486 = vmul.f32 %v476, 0.70710677
    %v487 = vmul.f32 %v478, 0.70710677
    %v488 = verf.f32.pop %v484
    %v489 = verf.f32.pop %v485
    %v490 = verf.f32.pop %v486
    %v491 = verf.f32.pop %v487
    %v492 = vadd.f32 %v488, 1.0
    %v493 = vadd.f32 %v489, 1.0
    %v494 = vadd.f32 %v490, 1.0
    %v495 = vadd.f32 %v491, 1.0
    %v496 = vmul.f32 %v480, %v492
    %v497 = vmul.f32 %v481, %v493
    %v498 = vmul.f32 %v482, %v494
    %v499 = vmul.f32 %v483, %v495
    %500 = vst [vmem:[#allocation6] sm:$0xff] %v496
    %501 = vst [vmem:[#allocation6 + $0x8] sm:$0xff] %v497
    %s502 = scalar_lea.vmem [#allocation6], 16
    %503 = vst [vmem:[%s502] sm:$0xff] %v498
    %504 = vst [vmem:[%s502 + $0x8] sm:$0xff] %v499
    // Predicated region
    $region22: #{tpu_custom_call.1} parent=1 // pred_check
      _
    $region23: #{tpu_custom_call.1} parent=1 // pred_check_branch
      %506 = sbr.rel (0) target = $region25
    $region24: #{tpu_custom_call.1} parent=1 // pred_region
      %s508 = ssub.s32 512, 512
      %509 = vsyncadd [#allocation5], %s508
      %s510 = sshll.u32 [#allocation6], 4
      %s511 = int_to_ptr.vmem [resolvable:$true] %s510
      %516 = dma.vmem_to_hbm [thread:$0]  %s511, 512, %s4, [#allocation5], 256, 256, 16
    $region25: #{tpu_custom_call.1} parent=1 // pred_fallthru
      _
    // Predicated region
    $region26: #{tpu_custom_call.1} parent=1 // pred_check
      _
    $region27: #{tpu_custom_call.1} parent=1 // pred_check_branch
      %518 = sbr.rel (0) target = $region29
    $region28: #{tpu_custom_call.1} parent=1 // pred_region
      %519 = dma.done [#allocation5], 512
    $region29: #{tpu_custom_call.1} parent=1 // pred_fallthru
      _
    %520 = vsyncpa [#allocation4], 1
    %521 = vsyncpa [#allocation5], 1

</llo_original>
